<compile_context>
chip_gen: v7x
topology: tpu7x:2x2x1
jax: 0.10.0
libtpu: 0.0.40
codegen_flags: <defaults>
</compile_context>

<pallas_src>
from functools import partial

import jax
import jax.numpy as jnp
import numpy as np
from jax.experimental import pallas as pl
from jax.experimental.pallas import tpu as pltpu

_LPAD = 128  # zero wing width of the flat depthwise buffer (vreg-aligned, >= W+1)


# ----------------------------------------------------------------------------
# Pallas kernel: fused branch2 for one block of Nb batch elements.
# ----------------------------------------------------------------------------
def _make_branch2_kernel(H, W, Cb, Nb, stride):
    HW = H * W
    Ho = (H - 1) // stride + 1
    Wo = (W - 1) // stride + 1
    NbCb = Nb * Cb

    def kernel(x_ref, w1_ref, b1_ref, dw_ref, w2_ref, b3_ref, out_ref,
               yext_ref, *stride2_scratch):
        f32 = jnp.float32
        w1 = w1_ref[...]
        b1 = b1_ref[...]
        w2 = w2_ref[...]
        b3 = b3_ref[...]

        # ---- clear ONLY the padding wings (interior fully overwritten) ----
        yext_ref[:, 0:_LPAD] = jnp.zeros((NbCb, _LPAD), f32)
        yext_ref[:, _LPAD + HW:_LPAD + HW + _LPAD] = jnp.zeros((NbCb, _LPAD), f32)

        # ---- 1x1 conv (MXU, per image); BN1 scale folded into w1; bias+ReLU.
        # Results are written straight into the zero-winged slab, stacking the
        # Nb images' channels on sublanes so the depthwise / element-wise work
        # below runs on full 8-sublane vregs even when Cb < 8.
        for n in range(Nb):
            y_n = jnp.dot(w1, x_ref[n], preferred_element_type=f32)  # (Cb, HW)
            y_n = jnp.maximum(y_n + b1, 0.0)
            yext_ref[n * Cb:(n + 1) * Cb, _LPAD:_LPAD + HW] = y_n

        # hoisted per-tap (NbCb, 1) weights (BN2 scale already folded in)
        taps = [dw_ref[:, t:t + 1] for t in range(9)]

        # ---- depthwise 3x3, padding=1 --------------------------------------
        if stride == 1:
            # Flat lane shift d = (kh-1)*W + (kw-1) of the zero-winged buffer;
            # the wings supply top/bottom padding, iota-built masks zero the
            # column wrap of the left/right taps (kw == 1 needs no mask).
            col = jax.lax.broadcasted_iota(jnp.int32, (1, HW), 1) % W
            mask_l = (col != 0).astype(f32)          # kw = 0 reads column w-1
            mask_r = (col != W - 1).astype(f32)      # kw = 2 reads column w+1
            acc = jnp.zeros((NbCb, HW), f32)
            for kw in range(3):
                part = jnp.zeros((NbCb, HW), f32)
                for kh in range(3):
                    d = (kh - 1) * W + (kw - 1)
                    part = part + (yext_ref[:, _LPAD + d:_LPAD + d + HW]
                                   * taps[kh * 3 + kw])
                if kw == 0:
                    part = part * mask_l
                elif kw == 2:
                    part = part * mask_r
                acc = acc + part
            z = acc                                           # (NbCb, HW)
        else:
            # stride 2: evaluate the taps only at output rows (contiguous
            # W-lane reads) and subsample columns with a tiny in-kernel
            # (W, Wo) 0/1 matmul -- no (HW, HWo) selection matrix.
            zsub_ref = stride2_scratch[0]
            colw = jax.lax.broadcasted_iota(jnp.int32, (1, W), 1)
            mask_l = (colw != 0).astype(f32)
            mask_r = (colw != W - 1).astype(f32)
            ci = jax.lax.broadcasted_iota(jnp.int32, (W, Wo), 0)
            ji = jax.lax.broadcasted_iota(jnp.int32, (W, Wo), 1)
            sw = (ci == stride * ji).astype(f32)              # (W, Wo) 0/1
            for i in range(Ho):
                racc = jnp.zeros((NbCb, W), f32)
                for kw in range(3):
                    part = jnp.zeros((NbCb, W), f32)
                    for kh in range(3):
                        off = _LPAD + (stride * i + kh - 1) * W + (kw - 1)
                        part = part + (yext_ref[:, off:off + W]
                                       * taps[kh * 3 + kw])
                    if kw == 0:
                        part = part * mask_l      # wrapped column 0 is kept
                    elif kw == 2 and (W - 1) % stride == 0:
                        # wrapped column W-1 survives the subsample only for
                        # odd W; for even W it is dropped, no mask needed.
                        part = part * mask_r
                    racc = racc + part
                zsub_ref[:, i * Wo:(i + 1) * Wo] = jnp.dot(
                    racc, sw, preferred_element_type=f32)
            z = zsub_ref[...]                                 # (NbCb, Ho*Wo)

        # ---- 1x1 conv (MXU, per image); BN3 scale folded into w2,
        #      BN2+BN3 biases folded into b3; bias + ReLU; writeback ---------
        for n in range(Nb):
            z_n = z[n * Cb:(n + 1) * Cb, :]
            o_n = jnp.dot(w2, z_n, preferred_element_type=f32)
            o_n = jnp.maximum(o_n + b3, 0.0)
            out_ref[n] = o_n.astype(out_ref.dtype)

    return kernel


def branch2_pallas(x_flat, kp, H, W, stride):
    """x_flat: (N, Cin, H*W) = NCHW with spatial flattened. -> (N, Cb, Ho*Wo)."""
    N, Cin, HW = x_flat.shape
    Cb = kp["w2f"].shape[0]
    Ho = (H - 1) // stride + 1
    Wo = (W - 1) // stride + 1
    HWo = Ho * Wo
    assert _LPAD >= W + 1

    # Batch Nb images per grid step: fill the 8 f32 sublanes when Cb < 8 and
    # amortize per-step overhead, but keep Nb a divisor of N so blocks stay
    # full (and keep grid > 1 when Cb >= 8 for multi-TC chips).
    nb_target = max(1, 8 // Cb)
    Nb = 1
    for d in range(1, N + 1):
        if N % d == 0 and d <= nb_target:
            Nb = d
    grid = (N // Nb,)

    dwf_tiled = jnp.tile(kp["dwf"], (Nb, 1))          # (Nb*Cb, 9) tap weights

    def const_spec(shape):
        return pl.BlockSpec(shape, lambda g: (0,) * len(shape))

    in_specs = [
        pl.BlockSpec((Nb, Cin, HW), lambda g: (g, 0, 0)),
        const_spec((Cb, Cin)),                  # w1f
        const_spec((Cb, 1)),                    # b1f
        const_spec((Nb * Cb, 9)),               # dwf tiled over the batch pack
        const_spec((Cb, Cb)),                   # w2f
        const_spec((Cb, 1)),                    # b3f
    ]
    args = [x_flat, kp["w1f"], kp["b1f"], dwf_tiled, kp["w2f"], kp["b3f"]]

    scratch = [pltpu.VMEM((Nb * Cb, _LPAD + HW + _LPAD), jnp.float32)]
    if stride == 2:
        scratch.append(pltpu.VMEM((Nb * Cb, HWo), jnp.float32))

    return pl.pallas_call(
        _make_branch2_kernel(H, W, Cb, Nb, stride),
        out_shape=jax.ShapeDtypeStruct((N, Cb, HWo), x_flat.dtype),
        grid=grid,
        in_specs=in_specs,
        out_specs=pl.BlockSpec((Nb, Cb, HWo), lambda g: (g, 0, 0)),
        scratch_shapes=scratch,
        compiler_params=pltpu.CompilerParams(
            dimension_semantics=("parallel",)),   # batch blocks: no carry
    )(*args)


# ----------------------------------------------------------------------------
# Host-side BN folding (eval mode) into conv weights / biases.
# ----------------------------------------------------------------------------
def fold_params(p):
    w1f = p["w1"] * p["s1"][:, None]                    # BN1 scale -> conv1
    b1f = p["b1"][:, None]
    dwf = p["dw"] * p["s2"][:, None]                    # BN2 scale -> depthwise
    w2f = p["w2"] * p["s3"][:, None]                    # BN3 scale -> conv2
    b3f = w2f @ p["b2"][:, None] + p["b3"][:, None]     # BN2 bias through conv2
    return dict(w1f=w1f, b1f=b1f, dwf=dwf, w2f=w2f, b3f=b3f)


# ----------------------------------------------------------------------------
# Glue (plain JAX): channel split / concat / shuffle; only free reshapes.
# ----------------------------------------------------------------------------
def channel_shuffle(x, groups):
    N, C, H, W = x.shape
    x = x.reshape(N, groups, C // groups, H, W)
    x = jnp.transpose(x, (0, 2, 1, 3, 4))
    return x.reshape(N, C, H, W)


@partial(jax.jit, static_argnames=("stride",))
def invert_residual(x, params, stride):
    """x: (N, C, H, W) NCHW.  Matches Invert_Residual.forward (eval-mode BN)."""
    N, C, H, W = x.shape
    kp = fold_params(params)
    Cb = kp["w2f"].shape[0]
    if stride == 1:
        x1, b2_in = x[:, :C // 2], x[:, C // 2:]
    else:
        x1, b2_in = None, x
    xf = b2_in.reshape(N, b2_in.shape[1], H * W)          # free NCHW view
    of = branch2_pallas(xf, kp, H, W, stride)             # (N, Cb, Ho*Wo)
    Ho = (H - 1) // stride + 1
    Wo = (W - 1) // stride + 1
    b2 = of.reshape(N, Cb, Ho, Wo)                        # free -> NCHW
    if stride == 1:
        out = jnp.concatenate([x1, b2], axis=1)
    else:
        # matches the reference forward, which concatenates branch2(x) twice
        out = jnp.concatenate([b2, b2], axis=1)
    return channel_shuffle(out, 2)


# ----------------------------------------------------------------------------
# Pure-JAX reference (independent path, unfolded BN params) for verification.
# ----------------------------------------------------------------------------
def _branch2_ref(x, p, stride):
    y = jnp.einsum("oc,nchw->nohw", p["w1"], x)
    y = jnp.maximum(y * p["s1"][None, :, None, None]
                    + p["b1"][None, :, None, None], 0.0)
    yp = jnp.pad(y, ((0, 0), (0, 0), (1, 1), (1, 1)))
    N, Cb, H, W = y.shape
    Ho = (H - 1) // stride + 1
    Wo = (W - 1) // stride + 1
    dw = p["dw"].reshape(Cb, 3, 3)
    acc = jnp.zeros((N, Cb, Ho, Wo), jnp.float32)
    for kh in range(3):
        for kw in range(3):
            patch = yp[:, :, kh:kh + stride * (Ho - 1) + 1:stride,
                       kw:kw + stride * (Wo - 1) + 1:stride]
            acc = acc + patch * dw[:, kh, kw][None, :, None, None]
    z = acc * p["s2"][None, :, None, None] + p["b2"][None, :, None, None]
    o = jnp.einsum("oc,nchw->nohw", p["w2"], z)
    return jnp.maximum(o * p["s3"][None, :, None, None]
                       + p["b3"][None, :, None, None], 0.0)


def invert_residual_ref(x, params, stride):
    Cb = params["w2"].shape[0]
    if stride == 1:
        x1, b2_in = x[:, :Cb], x[:, Cb:]
    else:
        x1, b2_in = None, x
    b2 = _branch2_ref(b2_in, params, stride)
    out = (jnp.concatenate([x1, b2], axis=1) if stride == 1
           else jnp.concatenate([b2, b2], axis=1))
    return channel_shuffle(out, 2)


# ----------------------------------------------------------------------------
# Deterministic parameter init (BN as eval-mode per-channel scale/bias).
# ----------------------------------------------------------------------------
def make_params(key, cin, cb):
    eps = 1e-5
    ks = jax.random.split(key, 6)

    def bn(k):
        k1, k2, k3, k4 = jax.random.split(k, 4)
        gamma = jax.random.uniform(k1, (cb,), jnp.float32, 0.5, 1.5)
        beta = 0.1 * jax.random.normal(k2, (cb,), jnp.float32)
        mean = 0.1 * jax.random.normal(k3, (cb,), jnp.float32)
        var = jax.random.uniform(k4, (cb,), jnp.float32, 0.5, 1.5)
        scale = gamma / jnp.sqrt(var + eps)
        return scale, beta - mean * scale

    w1 = 0.2 * jax.random.normal(ks[0], (cb, cin), jnp.float32)   # (out, in)
    dw = 0.2 * jax.random.normal(ks[1], (cb, 9), jnp.float32)     # 3x3 depthwise
    w2 = 0.2 * jax.random.normal(ks[2], (cb, cb), jnp.float32)
    s1, b1 = bn(ks[3]); s2, b2 = bn(ks[4]); s3, b3 = bn(ks[5])
    return dict(w1=w1, dw=dw, w2=w2, s1=s1, b1=b1, s2=s2, b2=b2, s3=s3, b3=b3)


if __name__ == "__main__":
    key = jax.random.PRNGKey(0)
    kx, kp1, kp2 = jax.random.split(key, 3)

    # --- stride=1: input_c == output_c == 8, branch_feature = 4 ---
    N, C, H, W = 2, 8, 16, 16
    x = jax.random.normal(kx, (N, C, H, W), jnp.float32)
    p1 = make_params(kp1, C // 2, C // 2)
    out1 = jax.block_until_ready(invert_residual(x, p1, stride=1))
    ref1 = invert_residual_ref(x, p1, stride=1)
    assert out1.shape == (N, C, H, W)
    np.testing.assert_allclose(np.asarray(out1), np.asarray(ref1),
                               rtol=2e-3, atol=2e-3)

    # --- stride=2: input_c = 8, output_c = 16, branch_feature = 8 ---
    Cin2, Cout2 = 8, 16
    x2 = jax.random.normal(kx, (N, Cin2, H, W), jnp.float32)
    p2 = make_params(kp2, Cin2, Cout2 // 2)
    out2 = jax.block_until_ready(invert_residual(x2, p2, stride=2))
    ref2 = invert_residual_ref(x2, p2, stride=2)
    assert out2.shape == (N, Cout2, H // 2, W // 2)
    np.testing.assert_allclose(np.asarray(out2), np.asarray(ref2),
                               rtol=2e-3, atol=2e-3)

    print("KERNEL_OK")
</pallas_src>

<mosaic_0001>
module attributes {stable_mosaic.version = 11 : i64} {
  func.func @kernel(%arg0: i32, %arg1: memref<2x4x256xf32, #tpu.memory_space<vmem>>, %arg2: memref<4x4xf32, #tpu.memory_space<vmem>>, %arg3: memref<4x1xf32, #tpu.memory_space<vmem>>, %arg4: memref<8x9xf32, #tpu.memory_space<vmem>>, %arg5: memref<4x4xf32, #tpu.memory_space<vmem>>, %arg6: memref<4x1xf32, #tpu.memory_space<vmem>>, %arg7: memref<2x4x256xf32, #tpu.memory_space<vmem>>, %arg8: memref<8x512xf32, #tpu.memory_space<vmem>>) attributes {dimension_semantics = [#tpu.dimension_semantics<parallel>], iteration_bounds = array<i64: 1>, scalar_prefetch = 0 : i64, scratch_operands = 1 : i64, tpu.core_type = #tpu.core_type<tc>, window_params = [{transform_indices = @transform_0, window_bounds = array<i64: 2, 4, 256>}, {pipeline_mode = #tpu.pipeline_mode<synchronous>, transform_indices = @transform_1, window_bounds = array<i64: 4, 4>}, {pipeline_mode = #tpu.pipeline_mode<synchronous>, transform_indices = @transform_2, window_bounds = array<i64: 4, 1>}, {pipeline_mode = #tpu.pipeline_mode<synchronous>, transform_indices = @transform_3, window_bounds = array<i64: 8, 9>}, {pipeline_mode = #tpu.pipeline_mode<synchronous>, transform_indices = @transform_4, window_bounds = array<i64: 4, 4>}, {pipeline_mode = #tpu.pipeline_mode<synchronous>, transform_indices = @transform_5, window_bounds = array<i64: 4, 1>}, {transform_indices = @transform_6, window_bounds = array<i64: 2, 4, 256>}]} {
    %c0 = arith.constant 0 : index
    %c0_0 = arith.constant 0 : index
    %0 = vector.load %arg2[%c0, %c0_0] : memref<4x4xf32, #tpu.memory_space<vmem>>, vector<4x4xf32>
    %c0_1 = arith.constant 0 : index
    %c0_2 = arith.constant 0 : index
    %1 = vector.load %arg3[%c0_1, %c0_2] : memref<4x1xf32, #tpu.memory_space<vmem>>, vector<4x1xf32>
    %c0_3 = arith.constant 0 : index
    %c0_4 = arith.constant 0 : index
    %2 = vector.load %arg5[%c0_3, %c0_4] : memref<4x4xf32, #tpu.memory_space<vmem>>, vector<4x4xf32>
    %c0_5 = arith.constant 0 : index
    %c0_6 = arith.constant 0 : index
    %3 = vector.load %arg6[%c0_5, %c0_6] : memref<4x1xf32, #tpu.memory_space<vmem>>, vector<4x1xf32>
    %cst = arith.constant 0.000000e+00 : f32
    %4 = vector.broadcast %cst : f32 to vector<8x128xf32>
    %c0_7 = arith.constant 0 : index
    %c0_8 = arith.constant 0 : index
    %5 = vector.load %arg8[%c0_7, %c0_8] : memref<8x512xf32, #tpu.memory_space<vmem>>, vector<8x128xf32>
    tpu.vector_store %arg8[%c0_7, %c0_8], %4 {strides = array<i32>} : memref<8x512xf32, #tpu.memory_space<vmem>>, vector<8x128xf32>,
    %cst_9 = arith.constant 0.000000e+00 : f32
    %6 = vector.broadcast %cst_9 : f32 to vector<8x128xf32>
    %c0_10 = arith.constant 0 : index
    %c384 = arith.constant 384 : index
    %7 = vector.load %arg8[%c0_10, %c384] : memref<8x512xf32, #tpu.memory_space<vmem>>, vector<8x128xf32>
    tpu.vector_store %arg8[%c0_10, %c384], %6 {strides = array<i32>} : memref<8x512xf32, #tpu.memory_space<vmem>>, vector<8x128xf32>,
    %c0_11 = arith.constant 0 : index
    %c0_12 = arith.constant 0 : index
    %c0_13 = arith.constant 0 : index
    %8 = vector.load %arg1[%c0_11, %c0_12, %c0_13] : memref<2x4x256xf32, #tpu.memory_space<vmem>>, vector<1x4x256xf32>
    %9 = vector.shape_cast %8 : vector<1x4x256xf32> to vector<4x256xf32>
    %cst_14 = arith.constant dense<0.000000e+00> : vector<4x256xf32>
    %10 = tpu.matmul %0, %9, %cst_14 {dimension_numbers = #tpu.dot_dimension_numbers<[1], [0], [0], [1], [0, 0, 1, 1], [], []>} : vector<4x4xf32>, vector<4x256xf32>, vector<4x256xf32> -> vector<4x256xf32>
    %11 = vector.broadcast %1 : vector<4x1xf32> to vector<4x256xf32>
    %12 = arith.addf %10, %11 : vector<4x256xf32>
    %cst_15 = arith.constant 0.000000e+00 : f32
    %13 = vector.broadcast %cst_15 : f32 to vector<4x256xf32>
    %14 = arith.maximumf %12, %13 : vector<4x256xf32>
    %c0_16 = arith.constant 0 : index
    %c128 = arith.constant 128 : index
    %15 = vector.load %arg8[%c0_16, %c128] : memref<8x512xf32, #tpu.memory_space<vmem>>, vector<4x256xf32>
    tpu.vector_store %arg8[%c0_16, %c128], %14 {strides = array<i32>} : memref<8x512xf32, #tpu.memory_space<vmem>>, vector<4x256xf32>,
    %c1 = arith.constant 1 : index
    %c0_17 = arith.constant 0 : index
    %c0_18 = arith.constant 0 : index
    %16 = vector.load %arg1[%c1, %c0_17, %c0_18] : memref<2x4x256xf32, #tpu.memory_space<vmem>>, vector<1x4x256xf32>
    %17 = vector.shape_cast %16 : vector<1x4x256xf32> to vector<4x256xf32>
    %cst_19 = arith.constant dense<0.000000e+00> : vector<4x256xf32>
    %18 = tpu.matmul %0, %17, %cst_19 {dimension_numbers = #tpu.dot_dimension_numbers<[1], [0], [0], [1], [0, 0, 1, 1], [], []>} : vector<4x4xf32>, vector<4x256xf32>, vector<4x256xf32> -> vector<4x256xf32>
    %19 = vector.broadcast %1 : vector<4x1xf32> to vector<4x256xf32>
    %20 = arith.addf %18, %19 : vector<4x256xf32>
    %cst_20 = arith.constant 0.000000e+00 : f32
    %21 = vector.broadcast %cst_20 : f32 to vector<4x256xf32>
    %22 = arith.maximumf %20, %21 : vector<4x256xf32>
    %c4 = arith.constant 4 : index
    %c128_21 = arith.constant 128 : index
    %23 = vector.load %arg8[%c4, %c128_21] : memref<8x512xf32, #tpu.memory_space<vmem>>, vector<4x256xf32>
    tpu.vector_store %arg8[%c4, %c128_21], %22 {strides = array<i32>} : memref<8x512xf32, #tpu.memory_space<vmem>>, vector<4x256xf32>,
    %c0_22 = arith.constant 0 : index
    %c0_23 = arith.constant 0 : index
    %24 = vector.load %arg4[%c0_22, %c0_23] : memref<8x9xf32, #tpu.memory_space<vmem>>, vector<8x1xf32>
    %c0_24 = arith.constant 0 : index
    %c1_25 = arith.constant 1 : index
    %25 = vector.load %arg4[%c0_24, %c1_25] : memref<8x9xf32, #tpu.memory_space<vmem>>, vector<8x1xf32>
    %c0_26 = arith.constant 0 : index
    %c2 = arith.constant 2 : index
    %26 = vector.load %arg4[%c0_26, %c2] : memref<8x9xf32, #tpu.memory_space<vmem>>, vector<8x1xf32>
    %c0_27 = arith.constant 0 : index
    %c3 = arith.constant 3 : index
    %27 = vector.load %arg4[%c0_27, %c3] : memref<8x9xf32, #tpu.memory_space<vmem>>, vector<8x1xf32>
    %c0_28 = arith.constant 0 : index
    %c4_29 = arith.constant 4 : index
    %28 = vector.load %arg4[%c0_28, %c4_29] : memref<8x9xf32, #tpu.memory_space<vmem>>, vector<8x1xf32>
    %c0_30 = arith.constant 0 : index
    %c5 = arith.constant 5 : index
    %29 = vector.load %arg4[%c0_30, %c5] : memref<8x9xf32, #tpu.memory_space<vmem>>, vector<8x1xf32>
    %c0_31 = arith.constant 0 : index
    %c6 = arith.constant 6 : index
    %30 = vector.load %arg4[%c0_31, %c6] : memref<8x9xf32, #tpu.memory_space<vmem>>, vector<8x1xf32>
    %c0_32 = arith.constant 0 : index
    %c7 = arith.constant 7 : index
    %31 = vector.load %arg4[%c0_32, %c7] : memref<8x9xf32, #tpu.memory_space<vmem>>, vector<8x1xf32>
    %c0_33 = arith.constant 0 : index
    %c8 = arith.constant 8 : index
    %32 = vector.load %arg4[%c0_33, %c8] : memref<8x9xf32, #tpu.memory_space<vmem>>, vector<8x1xf32>
    %33 = tpu.iota {dimensions = array<i32: 1>} : vector<1x256xi32>
    %c16_i32 = arith.constant 16 : i32
    %c0_i32 = arith.constant 0 : i32
    %34 = arith.cmpi eq, %c16_i32, %c0_i32 : i32
    %c1_i32 = arith.constant 1 : i32
    %35 = arith.select %34, %c1_i32, %c16_i32 : i32
    %36 = vector.broadcast %35 : i32 to vector<1x256xi32>
    %37 = arith.remsi %33, %36 : vector<1x256xi32>
    %c0_i32_34 = arith.constant 0 : i32
    %38 = vector.broadcast %c0_i32_34 : i32 to vector<1x256xi32>
    %39 = arith.cmpi ne, %37, %38 : vector<1x256xi32>
    %c0_i32_35 = arith.constant 0 : i32
    %40 = vector.broadcast %c0_i32_35 : i32 to vector<1x256xi32>
    %41 = arith.cmpi slt, %37, %40 : vector<1x256xi32>
    %c0_i32_36 = arith.constant 0 : i32
    %42 = arith.cmpi slt, %35, %c0_i32_36 : i32
    %43 = vector.broadcast %42 : i1 to vector<1x256xi1>
    %44 = vector.broadcast %43 : vector<1x256xi1> to vector<1x256xi1>
    %45 = arith.xori %41, %44 : vector<1x256xi1>
    %46 = arith.andi %45, %39 : vector<1x256xi1>
    %47 = vector.broadcast %35 : i32 to vector<1x256xi32>
    %48 = arith.addi %37, %47 : vector<1x256xi32>
    %49 = arith.select %46, %48, %37 : vector<1x256xi1>, vector<1x256xi32>
    %c0_i32_37 = arith.constant 0 : i32
    %50 = vector.broadcast %c0_i32_37 : i32 to vector<1x256xi32>
    %51 = arith.cmpi ne, %49, %50 : vector<1x256xi32>
    %52 = arith.extui %51 : vector<1x256xi1> to vector<1x256xi32>
    %53 = arith.sitofp %52 : vector<1x256xi32> to vector<1x256xf32>
    %c15_i32 = arith.constant 15 : i32
    %54 = vector.broadcast %c15_i32 : i32 to vector<1x256xi32>
    %55 = arith.cmpi ne, %49, %54 : vector<1x256xi32>
    %56 = arith.extui %55 : vector<1x256xi1> to vector<1x256xi32>
    %57 = arith.sitofp %56 : vector<1x256xi32> to vector<1x256xf32>
    %cst_38 = arith.constant 0.000000e+00 : f32
    %58 = vector.broadcast %cst_38 : f32 to vector<8x256xf32>
    %cst_39 = arith.constant 0.000000e+00 : f32
    %59 = vector.broadcast %cst_39 : f32 to vector<8x256xf32>
    %c0_40 = arith.constant 0 : index
    %c111 = arith.constant 111 : index
    %60 = vector.load %arg8[%c0_40, %c111] : memref<8x512xf32, #tpu.memory_space<vmem>>, vector<8x256xf32>
    %61 = vector.broadcast %24 : vector<8x1xf32> to vector<8x256xf32>
    %62 = arith.mulf %60, %61 : vector<8x256xf32>
    %63 = arith.addf %59, %62 : vector<8x256xf32>
    %c0_41 = arith.constant 0 : index
    %c127 = arith.constant 127 : index
    %64 = vector.load %arg8[%c0_41, %c127] : memref<8x512xf32, #tpu.memory_space<vmem>>, vector<8x256xf32>
    %65 = vector.broadcast %27 : vector<8x1xf32> to vector<8x256xf32>
    %66 = arith.mulf %64, %65 : vector<8x256xf32>
    %67 = arith.addf %63, %66 : vector<8x256xf32>
    %c0_42 = arith.constant 0 : index
    %c143 = arith.constant 143 : index
    %68 = vector.load %arg8[%c0_42, %c143] : memref<8x512xf32, #tpu.memory_space<vmem>>, vector<8x256xf32>
    %69 = vector.broadcast %30 : vector<8x1xf32> to vector<8x256xf32>
    %70 = arith.mulf %68, %69 : vector<8x256xf32>
    %71 = arith.addf %67, %70 : vector<8x256xf32>
    %72 = vector.broadcast %53 : vector<1x256xf32> to vector<8x256xf32>
    %73 = arith.mulf %71, %72 : vector<8x256xf32>
    %74 = arith.addf %58, %73 : vector<8x256xf32>
    %cst_43 = arith.constant 0.000000e+00 : f32
    %75 = vector.broadcast %cst_43 : f32 to vector<8x256xf32>
    %c0_44 = arith.constant 0 : index
    %c112 = arith.constant 112 : index
    %76 = vector.load %arg8[%c0_44, %c112] : memref<8x512xf32, #tpu.memory_space<vmem>>, vector<8x256xf32>
    %77 = vector.broadcast %25 : vector<8x1xf32> to vector<8x256xf32>
    %78 = arith.mulf %76, %77 : vector<8x256xf32>
    %79 = arith.addf %75, %78 : vector<8x256xf32>
    %c0_45 = arith.constant 0 : index
    %c128_46 = arith.constant 128 : index
    %80 = vector.load %arg8[%c0_45, %c128_46] : memref<8x512xf32, #tpu.memory_space<vmem>>, vector<8x256xf32>
    %81 = vector.broadcast %28 : vector<8x1xf32> to vector<8x256xf32>
    %82 = arith.mulf %80, %81 : vector<8x256xf32>
    %83 = arith.addf %79, %82 : vector<8x256xf32>
    %c0_47 = arith.constant 0 : index
    %c144 = arith.constant 144 : index
    %84 = vector.load %arg8[%c0_47, %c144] : memref<8x512xf32, #tpu.memory_space<vmem>>, vector<8x256xf32>
    %85 = vector.broadcast %31 : vector<8x1xf32> to vector<8x256xf32>
    %86 = arith.mulf %84, %85 : vector<8x256xf32>
    %87 = arith.addf %83, %86 : vector<8x256xf32>
    %88 = arith.addf %74, %87 : vector<8x256xf32>
    %cst_48 = arith.constant 0.000000e+00 : f32
    %89 = vector.broadcast %cst_48 : f32 to vector<8x256xf32>
    %c0_49 = arith.constant 0 : index
    %c113 = arith.constant 113 : index
    %90 = vector.load %arg8[%c0_49, %c113] : memref<8x512xf32, #tpu.memory_space<vmem>>, vector<8x256xf32>
    %91 = vector.broadcast %26 : vector<8x1xf32> to vector<8x256xf32>
    %92 = arith.mulf %90, %91 : vector<8x256xf32>
    %93 = arith.addf %89, %92 : vector<8x256xf32>
    %c0_50 = arith.constant 0 : index
    %c129 = arith.constant 129 : index
    %94 = vector.load %arg8[%c0_50, %c129] : memref<8x512xf32, #tpu.memory_space<vmem>>, vector<8x256xf32>
    %95 = vector.broadcast %29 : vector<8x1xf32> to vector<8x256xf32>
    %96 = arith.mulf %94, %95 : vector<8x256xf32>
    %97 = arith.addf %93, %96 : vector<8x256xf32>
    %c0_51 = arith.constant 0 : index
    %c145 = arith.constant 145 : index
    %98 = vector.load %arg8[%c0_51, %c145] : memref<8x512xf32, #tpu.memory_space<vmem>>, vector<8x256xf32>
    %99 = vector.broadcast %32 : vector<8x1xf32> to vector<8x256xf32>
    %100 = arith.mulf %98, %99 : vector<8x256xf32>
    %101 = arith.addf %97, %100 : vector<8x256xf32>
    %102 = vector.broadcast %57 : vector<1x256xf32> to vector<8x256xf32>
    %103 = arith.mulf %101, %102 : vector<8x256xf32>
    %104 = arith.addf %88, %103 : vector<8x256xf32>
    %105 = vector.extract_strided_slice %104 {offsets = [0, 0], sizes = [4, 256], strides = [1, 1]} : vector<8x256xf32> to vector<4x256xf32>
    %cst_52 = arith.constant dense<0.000000e+00> : vector<4x256xf32>
    %106 = tpu.matmul %2, %105, %cst_52 {dimension_numbers = #tpu.dot_dimension_numbers<[1], [0], [0], [1], [0, 0, 1, 1], [], []>} : vector<4x4xf32>, vector<4x256xf32>, vector<4x256xf32> -> vector<4x256xf32>
    %107 = vector.broadcast %3 : vector<4x1xf32> to vector<4x256xf32>
    %108 = arith.addf %106, %107 : vector<4x256xf32>
    %cst_53 = arith.constant 0.000000e+00 : f32
    %109 = vector.broadcast %cst_53 : f32 to vector<4x256xf32>
    %110 = arith.maximumf %108, %109 : vector<4x256xf32>
    %c0_54 = arith.constant 0 : index
    %c0_55 = arith.constant 0 : index
    %c0_56 = arith.constant 0 : index
    %111 = vector.load %arg7[%c0_54, %c0_55, %c0_56] : memref<2x4x256xf32, #tpu.memory_space<vmem>>, vector<1x4x256xf32>
    %112 = vector.shape_cast %111 : vector<1x4x256xf32> to vector<4x256xf32>
    %113 = vector.shape_cast %110 : vector<4x256xf32> to vector<1x4x256xf32>
    tpu.vector_store %arg7[%c0_54, %c0_55, %c0_56], %113 {strides = array<i32>} : memref<2x4x256xf32, #tpu.memory_space<vmem>>, vector<1x4x256xf32>,
    %114 = vector.extract_strided_slice %104 {offsets = [4, 0], sizes = [4, 256], strides = [1, 1]} : vector<8x256xf32> to vector<4x256xf32>
    %cst_57 = arith.constant dense<0.000000e+00> : vector<4x256xf32>
    %115 = tpu.matmul %2, %114, %cst_57 {dimension_numbers = #tpu.dot_dimension_numbers<[1], [0], [0], [1], [0, 0, 1, 1], [], []>} : vector<4x4xf32>, vector<4x256xf32>, vector<4x256xf32> -> vector<4x256xf32>
    %116 = vector.broadcast %3 : vector<4x1xf32> to vector<4x256xf32>
    %117 = arith.addf %115, %116 : vector<4x256xf32>
    %cst_58 = arith.constant 0.000000e+00 : f32
    %118 = vector.broadcast %cst_58 : f32 to vector<4x256xf32>
    %119 = arith.maximumf %117, %118 : vector<4x256xf32>
    %c1_59 = arith.constant 1 : index
    %c0_60 = arith.constant 0 : index
    %c0_61 = arith.constant 0 : index
    %120 = vector.load %arg7[%c1_59, %c0_60, %c0_61] : memref<2x4x256xf32, #tpu.memory_space<vmem>>, vector<1x4x256xf32>
    %121 = vector.shape_cast %120 : vector<1x4x256xf32> to vector<4x256xf32>
    %122 = vector.shape_cast %119 : vector<4x256xf32> to vector<1x4x256xf32>
    tpu.vector_store %arg7[%c1_59, %c0_60, %c0_61], %122 {strides = array<i32>} : memref<2x4x256xf32, #tpu.memory_space<vmem>>, vector<1x4x256xf32>,
    return
  }
  func.func @transform_0(%arg0: i32) -> (i32, i32, i32) {
    %c0_i32 = arith.constant 0 : i32
    %c0_i32_0 = arith.constant 0 : i32
    %c0_i32_1 = arith.constant 0 : i32
    return %arg0, %c0_i32, %c0_i32_0 : i32, i32, i32
  }
  func.func @transform_1(%arg0: i32) -> (i32, i32) {
    %c0_i32 = arith.constant 0 : i32
    %c0_i32_0 = arith.constant 0 : i32
    %c0_i32_1 = arith.constant 0 : i32
    return %c0_i32, %c0_i32_0 : i32, i32
  }
  func.func @transform_2(%arg0: i32) -> (i32, i32) {
    %c0_i32 = arith.constant 0 : i32
    %c0_i32_0 = arith.constant 0 : i32
    %c0_i32_1 = arith.constant 0 : i32
    return %c0_i32, %c0_i32_0 : i32, i32
  }
  func.func @transform_3(%arg0: i32) -> (i32, i32) {
    %c0_i32 = arith.constant 0 : i32
    %c0_i32_0 = arith.constant 0 : i32
    %c0_i32_1 = arith.constant 0 : i32
    return %c0_i32, %c0_i32_0 : i32, i32
  }
  func.func @transform_4(%arg0: i32) -> (i32, i32) {
    %c0_i32 = arith.constant 0 : i32
    %c0_i32_0 = arith.constant 0 : i32
    %c0_i32_1 = arith.constant 0 : i32
    return %c0_i32, %c0_i32_0 : i32, i32
  }
  func.func @transform_5(%arg0: i32) -> (i32, i32) {
    %c0_i32 = arith.constant 0 : i32
    %c0_i32_0 = arith.constant 0 : i32
    %c0_i32_1 = arith.constant 0 : i32
    return %c0_i32, %c0_i32_0 : i32, i32
  }
  func.func @transform_6(%arg0: i32) -> (i32, i32, i32) {
    %c0_i32 = arith.constant 0 : i32
    %c0_i32_0 = arith.constant 0 : i32
    %c0_i32_1 = arith.constant 0 : i32
    return %arg0, %c0_i32, %c0_i32_0 : i32, i32, i32
  }
}

</mosaic_0001>

<llo_original>
// kernel: invert_residual.1
$region0: #{invert_residual.1}
  #allocation0 [shape = 'u32[]', space=smem, size = 0x4, offset = 0x4, fixed_abs, tag = 'smem constant byte address 0x4 - core index']
  #allocation1 [shape = 'u32[144,128]{1,0:T(1,128)}', space=vmem, size = 0x12000, scoped, tag = 'internal scratch']
  #allocation2 [shape = 'f32[8,512]{1,0:T(8,128)}', space=vmem, size = 0x4000, scoped, tag = 'scratch operand']
  %s0 = inlined_call_operand.vmem [shape: f32[2,4,256], index: 0, kind: input, shape index: {}]
  %s1 = inlined_call_operand.vmem [shape: f32[4,4], index: 1, kind: input, shape index: {}]
  %s2 = inlined_call_operand.vmem [shape: f32[4,1], index: 2, kind: input, shape index: {}]
  %s3 = inlined_call_operand.vmem [shape: f32[8,9], index: 3, kind: input, shape index: {}]
  %s4 = inlined_call_operand.vmem [shape: f32[4,4], index: 4, kind: input, shape index: {}]
  %s5 = inlined_call_operand.vmem [shape: f32[4,1], index: 5, kind: input, shape index: {}]
  %s6 = inlined_call_operand.vmem [shape: f32[2,4,256], index: 6, kind: output, shape index: {}]
  %s7 = sld [smem:[#allocation0]]
  $region34: #{invert_residual.1} parent=0
    _
  %s9 = ssub.s32 1, %s7
  %s10 = scalar_select 0, %s9, %s7
  // Predicated region
  $region2: #{invert_residual.1} parent=0 // pred_check
    _
  $region3: #{invert_residual.1} parent=0 // pred_check_branch
    %12 = sbr.rel (0) target = $region5
  $region4: #{invert_residual.1} parent=0 // pred_region
    _
  $region5: #{invert_residual.1} parent=0 // pred_fallthru
    _
  // Predicated region
  $region6: #{invert_residual.1} parent=0 // pred_check
    _
  $region7: #{invert_residual.1} parent=0 // pred_check_branch
    %14 = sbr.rel (0) target = $region9
  $region8: #{invert_residual.1} parent=0 // pred_region
    _
  $region9: #{invert_residual.1} parent=0 // pred_fallthru
    _
  // Predicated region
  $region10: #{invert_residual.1} parent=0 // pred_check
    _
  $region11: #{invert_residual.1} parent=0 // pred_check_branch
    %16 = sbr.rel (0) target = $region13
  $region12: #{invert_residual.1} parent=0 // pred_region
    _
  $region13: #{invert_residual.1} parent=0 // pred_fallthru
    _
  // Predicated region
  $region14: #{invert_residual.1} parent=0 // pred_check
    _
  $region15: #{invert_residual.1} parent=0 // pred_check_branch
    %18 = sbr.rel (0) target = $region17
  $region16: #{invert_residual.1} parent=0 // pred_region
    _
  $region17: #{invert_residual.1} parent=0 // pred_fallthru
    _
  // Predicated region
  $region18: #{invert_residual.1} parent=0 // pred_check
    _
  $region19: #{invert_residual.1} parent=0 // pred_check_branch
    %20 = sbr.rel (0) target = $region21
  $region20: #{invert_residual.1} parent=0 // pred_region
    _
  $region21: #{invert_residual.1} parent=0 // pred_fallthru
    _
  // Predicated region
  $region22: #{invert_residual.1} parent=0 // pred_check
    _
  $region23: #{invert_residual.1} parent=0 // pred_check_branch
    %22 = sbr.rel (0) target = $region25
  $region24: #{invert_residual.1} parent=0 // pred_region
    _
  $region25: #{invert_residual.1} parent=0 // pred_fallthru
    _
  %v23 = vld [vmem:[%s1] sm:$0xf]
  %v24 = vld [vmem:[%s2] sm:$0xf]
  %v25 = vld [vmem:[%s4] sm:$0xf]
  %v26 = vld [vmem:[%s5] sm:$0xf]
  %27 = vst [vmem:[#allocation2] sm:$0xff] 0.0
  %28 = vst [vmem:[#allocation2 + $0x18] sm:$0xff] 0.0
  %v29 = vld [vmem:[%s0] sm:$0xff]
  %31 = vset.pattern.permute.xlu0 0
  %32 = vperm.xlu0 %31, %v24
  %v33 = vpop.permute.xlu0 %32
  %v36 = vcombine.high %v29, %v29
  %vm37 = vcmask 31744
  %v39 = vsel %vm37, %v23, 0
  %vm41 = vcmask 1043456
  %v42 = vsel %vm41, %v29, 0
  %v44 = vsel %vm41, %v36, 0
  %46 = vmatprep.subr.mxu0 %v44
  %47 = vmatpush1.msra.mxu0 %v42
  %48 = vmatprep.subr.mxu0 0.0
  %49 = vmatpush1.msra.mxu0 0.0
  %50 = vmatprep.subr.mxu0 0.0
  %51 = vmatpush1.msra.mxu0 0.0
  %52 = vmatprep.subr.mxu0 0.0
  %53 = vmatpush1.msra.mxu0 0.0
  %54 = vmatprep.subr.mxu0 0.0
  %55 = vmatpush1.msra.mxu0 0.0
  %56 = vmatprep.subr.mxu0 0.0
  %57 = vmatpush1.msra.mxu0 0.0
  %58 = vmatprep.subr.mxu0 0.0
  %59 = vmatpush1.msra.mxu0 0.0
  %60 = vmatprep.subr.mxu0 0.0
  %61 = vmatpush1.msra.mxu0 0.0
  %62 = vmatprep.subr.mxu0 0.0
  %63 = vmatpush1.msra.mxu0 0.0
  %64 = vmatprep.subr.mxu0 0.0
  %65 = vmatpush1.msra.mxu0 0.0
  %66 = vmatprep.subr.mxu0 0.0
  %67 = vmatpush1.msra.mxu0 0.0
  %68 = vmatprep.subr.mxu0 0.0
  %69 = vmatpush1.msra.mxu0 0.0
  %70 = vmatprep.subr.mxu0 0.0
  %71 = vmatpush1.msra.mxu0 0.0
  %72 = vmatprep.subr.mxu0 0.0
  %73 = vmatpush1.msra.mxu0 0.0
  %74 = vmatprep.subr.mxu0 0.0
  %75 = vmatpush1.msra.mxu0 0.0
  %76 = vmatprep.subr.mxu0 0.0
  %77 = vmatpush1.msra.mxu0 0.0
  %78 = vmatprep.subr.mxu0 0.0
  %79 = vmatpush1.msra.mxu0 0.0
  %80 = vmatprep.subr.mxu0 0.0
  %81 = vmatpush1.msra.mxu0 0.0
  %82 = vmatprep.subr.mxu0 0.0
  %83 = vmatpush1.msra.mxu0 0.0
  %84 = vmatprep.subr.mxu0 0.0
  %85 = vmatpush1.msra.mxu0 0.0
  %86 = vmatprep.subr.mxu0 0.0
  %87 = vmatpush1.msra.mxu0 0.0
  %88 = vmatprep.subr.mxu0 0.0
  %89 = vmatpush1.msra.mxu0 0.0
  %90 = vmatprep.subr.mxu0 0.0
  %91 = vmatpush1.msra.mxu0 0.0
  %92 = vmatprep.subr.mxu0 0.0
  %93 = vmatpush1.msra.mxu0 0.0
  %94 = vmatprep.subr.mxu0 0.0
  %95 = vmatpush1.msra.mxu0 0.0
  %96 = vmatprep.subr.mxu0 0.0
  %97 = vmatpush1.msra.mxu0 0.0
  %98 = vmatprep.subr.mxu0 0.0
  %99 = vmatpush1.msra.mxu0 0.0
  %100 = vmatprep.subr.mxu0 0.0
  %101 = vmatpush1.msra.mxu0 0.0
  %102 = vmatprep.subr.mxu0 0.0
  %103 = vmatpush1.msra.mxu0 0.0
  %104 = vmatprep.subr.mxu0 0.0
  %105 = vmatpush1.msra.mxu0 0.0
  %106 = vmatprep.subr.mxu0 0.0
  %107 = vmatpush1.msra.mxu0 0.0
  %108 = vmatprep.subr.mxu0 0.0
  %109 = vmatpush1.msra.mxu0 0.0
  %110 = vmatprep.mubr.f32.mxu0 0.0
  %111 = vmatmul.mubr.f32.gmra.mrb[0].mxu0 %v39
  %v112 = vpop.f32.mrb[0].mxu0
  %v113 = vadd.f32 %v33, %v112
  %v114 = vpop.f32.mrb[0].mxu0
  %v115 = vadd.f32 %v33, %v114
  %116 = vdwg.mxu0
  %v117 = vmax.f32 %v113, 0.0
  %v118 = vmax.f32 %v115, 0.0
  %119 = vst [vmem:[#allocation2 + $0x8] sm:$0xf] %v117
  %120 = vst [vmem:[#allocation2 + $0x10] sm:$0xf] %v118
  %s121 = scalar_lea.vmem %s0, 8
  %v122 = vld [vmem:[%s121] sm:$0xff]
  %v124 = vcombine.high %v122, %v122
  %v125 = vsel %vm41, %v122, 0
  %v127 = vsel %vm41, %v124, 0
  %129 = vmatprep.subr.mxu0 %v127
  %130 = vmatpush1.msra.mxu0 %v125
  %131 = vmatprep.subr.mxu0 0.0
  %132 = vmatpush1.msra.mxu0 0.0
  %133 = vmatprep.subr.mxu0 0.0
  %134 = vmatpush1.msra.mxu0 0.0
  %135 = vmatprep.subr.mxu0 0.0
  %136 = vmatpush1.msra.mxu0 0.0
  %137 = vmatprep.subr.mxu0 0.0
  %138 = vmatpush1.msra.mxu0 0.0
  %139 = vmatprep.subr.mxu0 0.0
  %140 = vmatpush1.msra.mxu0 0.0
  %141 = vmatprep.subr.mxu0 0.0
  %142 = vmatpush1.msra.mxu0 0.0
  %143 = vmatprep.subr.mxu0 0.0
  %144 = vmatpush1.msra.mxu0 0.0
  %145 = vmatprep.subr.mxu0 0.0
  %146 = vmatpush1.msra.mxu0 0.0
  %147 = vmatprep.subr.mxu0 0.0
  %148 = vmatpush1.msra.mxu0 0.0
  %149 = vmatprep.subr.mxu0 0.0
  %150 = vmatpush1.msra.mxu0 0.0
  %151 = vmatprep.subr.mxu0 0.0
  %152 = vmatpush1.msra.mxu0 0.0
  %153 = vmatprep.subr.mxu0 0.0
  %154 = vmatpush1.msra.mxu0 0.0
  %155 = vmatprep.subr.mxu0 0.0
  %156 = vmatpush1.msra.mxu0 0.0
  %157 = vmatprep.subr.mxu0 0.0
  %158 = vmatpush1.msra.mxu0 0.0
  %159 = vmatprep.subr.mxu0 0.0
  %160 = vmatpush1.msra.mxu0 0.0
  %161 = vmatprep.subr.mxu0 0.0
  %162 = vmatpush1.msra.mxu0 0.0
  %163 = vmatprep.subr.mxu0 0.0
  %164 = vmatpush1.msra.mxu0 0.0
  %165 = vmatprep.subr.mxu0 0.0
  %166 = vmatpush1.msra.mxu0 0.0
  %167 = vmatprep.subr.mxu0 0.0
  %168 = vmatpush1.msra.mxu0 0.0
  %169 = vmatprep.subr.mxu0 0.0
  %170 = vmatpush1.msra.mxu0 0.0
  %171 = vmatprep.subr.mxu0 0.0
  %172 = vmatpush1.msra.mxu0 0.0
  %173 = vmatprep.subr.mxu0 0.0
  %174 = vmatpush1.msra.mxu0 0.0
  %175 = vmatprep.subr.mxu0 0.0
  %176 = vmatpush1.msra.mxu0 0.0
  %177 = vmatprep.subr.mxu0 0.0
  %178 = vmatpush1.msra.mxu0 0.0
  %179 = vmatprep.subr.mxu0 0.0
  %180 = vmatpush1.msra.mxu0 0.0
  %181 = vmatprep.subr.mxu0 0.0
  %182 = vmatpush1.msra.mxu0 0.0
  %183 = vmatprep.subr.mxu0 0.0
  %184 = vmatpush1.msra.mxu0 0.0
  %185 = vmatprep.subr.mxu0 0.0
  %186 = vmatpush1.msra.mxu0 0.0
  %187 = vmatprep.subr.mxu0 0.0
  %188 = vmatpush1.msra.mxu0 0.0
  %189 = vmatprep.subr.mxu0 0.0
  %190 = vmatpush1.msra.mxu0 0.0
  %191 = vmatprep.subr.mxu0 0.0
  %192 = vmatpush1.msra.mxu0 0.0
  %193 = vmatprep.mubr.f32.mxu0 0.0
  %194 = vmatmul.mubr.f32.gmra.mrb[0].mxu0 %v39
  %v195 = vpop.f32.mrb[0].mxu0
  %v196 = vadd.f32 %v33, %v195
  %v197 = vpop.f32.mrb[0].mxu0
  %v198 = vadd.f32 %v33, %v197
  %199 = vdwg.mxu0
  %v200 = vmax.f32 %v196, 0.0
  %v201 = vmax.f32 %v198, 0.0
  %v204 = vrot.slane %v200, 4
  %v205 = vrot.slane %v201, 4
  %208 = vst [vmem:[#allocation2 + $0x8] sm:$0xf0] %v204
  %209 = vst [vmem:[#allocation2 + $0x10] sm:$0xf0] %v205
  %v210 = vld [vmem:[%s3] sm:$0xff]
  %v211 = vlaneseq
  %v212 = vand.u32 %v211, 127
  %v213 = vadd.s32 %v212, 128
  %vm214 = vcmp.lt.s32.totalorder %v212, 0
  %v215 = vsub.s32 0, %v212
  %v216 = vsel %vm214, %v215, %v212
  %v217 = vshrl.u32 %v216, 4
  %v218 = vand.u32 %v216, 15
  %v219 = vsub.s32 0, %v218
  %v220 = vsel %vm214, %v219, %v218
  %vm221 = vcmp.lt.s32.totalorder %v213, 0
  %v222 = vsub.s32 0, %v213
  %v223 = vsel %vm221, %v222, %v213
  %v224 = vshrl.u32 %v223, 4
  %v225 = vand.u32 %v223, 15
  %v226 = vsub.s32 0, %v225
  %v227 = vsel %vm221, %v226, %v225
  %vm228 = vcmp.ne.s32.totalorder %v220, 0
  %vm229 = vcmp.ne.s32.totalorder %v227, 0
  %vm230 = vcmp.lt.s32.totalorder %v220, 0
  %vm231 = vcmp.lt.s32.totalorder %v227, 0
  %vm232 = vmand %vm230, %vm228
  %vm233 = vmand %vm231, %vm229
  %v234 = vadd.s32 %v220, 16
  %v235 = vadd.s32 %v227, 16
  %v236 = vsel %vm232, %v234, %v220
  %v237 = vsel %vm233, %v235, %v227
  %vm238 = vcmp.ne.s32.totalorder %v236, 0
  %vm239 = vcmp.ne.s32.totalorder %v237, 0
  %v240 = vsel %vm238, 1, 0
  %v241 = vsel %vm239, 1, 0
  %v242 = vcvt.s32.f32 %v240
  %v243 = vcvt.s32.f32 %v241
  %vm244 = vcmp.ne.s32.totalorder %v236, 15
  %vm245 = vcmp.ne.s32.totalorder %v237, 15
  %v246 = vsel %vm244, 1, 0
  %v247 = vsel %vm245, 1, 0
  %v248 = vcvt.s32.f32 %v246
  %v249 = vcvt.s32.f32 %v247
  %v250 = vld [vmem:[#allocation2] sm:$0xff]
  %v251 = vld [vmem:[#allocation2 + $0x8] sm:$0xff]
  %v252 = vld [vmem:[#allocation2 + $0x10] sm:$0xff]
  %254 = vset.pattern.permute.xlu0 0
  %255 = vperm.xlu0 %254, %v210
  %v256 = vpop.permute.xlu0 %255
  %v258 = vmul.f32 %v250, %v256
  %v259 = vmul.f32 %v251, %v256
  %v260 = vmul.f32 %v252, %v256
  %v261 = vadd.f32 %v258, 0.0
  %v262 = vadd.f32 %v259, 0.0
  %v263 = vadd.f32 %v260, 0.0
  %264 = vset.pattern.permute.xlu0 3
  %265 = vperm.xlu0 %264, %v210
  %v266 = vpop.permute.xlu0 %265
  %v268 = vmul.f32 %v250, %v266
  %v269 = vmul.f32 %v251, %v266
  %v270 = vmul.f32 %v252, %v266
  %274 = vrot.lane.b32.xlu0 %v268, 112
  %v275 = vpop.permute.xlu0 %274
  %276 = vrot.lane.b32.xlu0 %v269, 112
  %v277 = vpop.permute.xlu0 %276
  %278 = vrot.lane.b32.xlu0 %v270, 112
  %v279 = vpop.permute.xlu0 %278
  %vm280 = vcmask 916480
  %v281 = vsel %vm280, %v275, %v277
  %v282 = vsel %vm280, %v277, %v279
  %v286 = vadd.f32 %v261, %v281
  %v287 = vadd.f32 %v262, %v282
  %v288 = vadd.f32 %v263, %v279
  %v289 = vld [vmem:[#allocation2 + $0x8] sm:$0xff]
  %v290 = vld [vmem:[#allocation2 + $0x10] sm:$0xff]
  %v291 = vld [vmem:[#allocation2 + $0x18] sm:$0xff]
  %292 = vset.pattern.permute.xlu0 6
  %293 = vperm.xlu0 %292, %v210
  %v294 = vpop.permute.xlu0 %293
  %v296 = vmul.f32 %v289, %v294
  %v297 = vmul.f32 %v290, %v294
  %v298 = vmul.f32 %v291, %v294
  %302 = vrot.lane.b32.xlu0 %v296, 96
  %v303 = vpop.permute.xlu0 %302
  %304 = vrot.lane.b32.xlu0 %v297, 96
  %v305 = vpop.permute.xlu0 %304
  %306 = vrot.lane.b32.xlu0 %v298, 96
  %v307 = vpop.permute.xlu0 %306
  %vm308 = vcmask 785408
  %v309 = vsel %vm308, %v303, %v305
  %v310 = vsel %vm308, %v305, %v307
  %v314 = vadd.f32 %v286, %v303
  %v315 = vadd.f32 %v287, %v309
  %v316 = vadd.f32 %v288, %v310
  %319 = vrot.lane.b32.xlu0 %v242, 111
  %v320 = vpop.permute.xlu0 %319
  %321 = vrot.lane.b32.xlu0 %v243, 111
  %v322 = vpop.permute.xlu0 %321
  %vm323 = vcmask 908288
  %v324 = vsel %vm323, %v320, %v322
  %v328 = vmul.f32 %v314, %v320
  %v329 = vmul.f32 %v315, %v324
  %v330 = vmul.f32 %v316, %v322
  %v331 = vadd.f32 %v328, 0.0
  %v332 = vadd.f32 %v329, 0.0
  %v333 = vadd.f32 %v330, 0.0
  %334 = vset.pattern.permute.xlu0 1
  %335 = vperm.xlu0 %334, %v210
  %v336 = vpop.permute.xlu0 %335
  %v338 = vmul.f32 %v250, %v336
  %v339 = vmul.f32 %v251, %v336
  %v340 = vmul.f32 %v252, %v336
  %v341 = vadd.f32 %v338, 0.0
  %v342 = vadd.f32 %v339, 0.0
  %v343 = vadd.f32 %v340, 0.0
  %344 = vset.pattern.permute.xlu0 4
  %345 = vperm.xlu0 %344, %v210
  %v346 = vpop.permute.xlu0 %345
  %v348 = vmul.f32 %v251, %v346
  %v349 = vmul.f32 %v252, %v346
  %352 = vrot.lane.b32.xlu0 %v348, 112
  %v353 = vpop.permute.xlu0 %352
  %354 = vrot.lane.b32.xlu0 %v349, 112
  %v355 = vpop.permute.xlu0 %354
  %v356 = vsel %vm280, %v353, %v355
  %v360 = vadd.f32 %v341, %v353
  %v361 = vadd.f32 %v342, %v356
  %v362 = vadd.f32 %v343, %v355
  %363 = vset.pattern.permute.xlu0 7
  %364 = vperm.xlu0 %363, %v210
  %v365 = vpop.permute.xlu0 %364
  %v367 = vmul.f32 %v289, %v365
  %v368 = vmul.f32 %v290, %v365
  %v369 = vmul.f32 %v291, %v365
  %373 = vrot.lane.b32.xlu0 %v367, 96
  %v374 = vpop.permute.xlu0 %373
  %375 = vrot.lane.b32.xlu0 %v368, 96
  %v376 = vpop.permute.xlu0 %375
  %377 = vrot.lane.b32.xlu0 %v369, 96
  %v378 = vpop.permute.xlu0 %377
  %v379 = vsel %vm308, %v374, %v376
  %v380 = vsel %vm308, %v376, %v378
  %v384 = vadd.f32 %v360, %v374
  %v385 = vadd.f32 %v361, %v379
  %v386 = vadd.f32 %v362, %v380
  %390 = vrot.lane.b32.xlu0 %v384, 127
  %v391 = vpop.permute.xlu0 %390
  %392 = vrot.lane.b32.xlu0 %v385, 127
  %v393 = vpop.permute.xlu0 %392
  %394 = vrot.lane.b32.xlu0 %v386, 127
  %v395 = vpop.permute.xlu0 %394
  %vm396 = vcmask 1039360
  %v397 = vsel %vm396, %v391, %v393
  %v398 = vsel %vm396, %v393, %v395
  %v402 = vadd.f32 %v331, %v397
  %v403 = vadd.f32 %v332, %v398
  %v404 = vadd.f32 %v333, %v395
  %405 = vset.pattern.permute.xlu0 2
  %406 = vperm.xlu0 %405, %v210
  %v407 = vpop.permute.xlu0 %406
  %v409 = vmul.f32 %v250, %v407
  %v410 = vmul.f32 %v251, %v407
  %v411 = vmul.f32 %v252, %v407
  %v412 = vadd.f32 %v409, 0.0
  %v413 = vadd.f32 %v410, 0.0
  %v414 = vadd.f32 %v411, 0.0
  %415 = vset.pattern.permute.xlu0 5
  %416 = vperm.xlu0 %415, %v210
  %v417 = vpop.permute.xlu0 %416
  %v419 = vmul.f32 %v289, %v417
  %v420 = vmul.f32 %v290, %v417
  %v421 = vmul.f32 %v291, %v417
  %425 = vrot.lane.b32.xlu0 %v419, 112
  %v426 = vpop.permute.xlu0 %425
  %427 = vrot.lane.b32.xlu0 %v420, 112
  %v428 = vpop.permute.xlu0 %427
  %429 = vrot.lane.b32.xlu0 %v421, 112
  %v430 = vpop.permute.xlu0 %429
  %v431 = vsel %vm280, %v426, %v428
  %v432 = vsel %vm280, %v428, %v430
  %v436 = vadd.f32 %v412, %v426
  %v437 = vadd.f32 %v413, %v431
  %v438 = vadd.f32 %v414, %v432
  %439 = vset.pattern.permute.xlu0 8
  %440 = vperm.xlu0 %439, %v210
  %v441 = vpop.permute.xlu0 %440
  %v443 = vmul.f32 %v289, %v441
  %v444 = vmul.f32 %v290, %v441
  %v445 = vmul.f32 %v291, %v441
  %449 = vrot.lane.b32.xlu0 %v443, 96
  %v450 = vpop.permute.xlu0 %449
  %451 = vrot.lane.b32.xlu0 %v444, 96
  %v452 = vpop.permute.xlu0 %451
  %453 = vrot.lane.b32.xlu0 %v445, 96
  %v454 = vpop.permute.xlu0 %453
  %v455 = vsel %vm308, %v450, %v452
  %v456 = vsel %vm308, %v452, %v454
  %v460 = vadd.f32 %v436, %v450
  %v461 = vadd.f32 %v437, %v455
  %v462 = vadd.f32 %v438, %v456
  %465 = vrot.lane.b32.xlu0 %v248, 113
  %v466 = vpop.permute.xlu0 %465
  %467 = vrot.lane.b32.xlu0 %v249, 113
  %v468 = vpop.permute.xlu0 %467
  %vm469 = vcmask 924672
  %v470 = vsel %vm469, %v466, %v468
  %v474 = vmul.f32 %v460, %v466
  %v475 = vmul.f32 %v461, %v470
  %v476 = vmul.f32 %v462, %v468
  %480 = vrot.lane.b32.xlu0 %v474, 126
  %v481 = vpop.permute.xlu0 %480
  %482 = vrot.lane.b32.xlu0 %v475, 126
  %v483 = vpop.permute.xlu0 %482
  %484 = vrot.lane.b32.xlu0 %v476, 126
  %v485 = vpop.permute.xlu0 %484
  %vm486 = vcmask 1031168
  %v487 = vsel %vm486, %v481, %v483
  %v488 = vsel %vm486, %v483, %v485
  %v492 = vadd.f32 %v402, %v487
  %v493 = vadd.f32 %v403, %v488
  %v494 = vadd.f32 %v404, %v485
  %496 = vset.pattern.permute.xlu0 0
  %497 = vperm.xlu0 %496, %v26
  %v498 = vpop.permute.xlu0 %497
  %503 = vrot.lane.b32.xlu0 %v492, 17
  %v504 = vpop.permute.xlu0 %503
  %505 = vrot.lane.b32.xlu0 %v493, 17
  %v506 = vpop.permute.xlu0 %505
  %507 = vrot.lane.b32.xlu0 %v494, 17
  %v508 = vpop.permute.xlu0 %507
  %vm509 = vcmask 138240
  %v510 = vsel %vm509, %v504, %v506
  %v511 = vsel %vm509, %v506, %v508
  %v513 = vsel %vm37, %v25, 0
  %v515 = vsel %vm41, %v510, 0
  %v517 = vsel %vm41, %v511, 0
  %519 = vmatprep.subr.mxu0 %v517
  %520 = vmatpush1.msra.mxu0 %v515
  %521 = vmatprep.subr.mxu0 0.0
  %522 = vmatpush1.msra.mxu0 0.0
  %523 = vmatprep.subr.mxu0 0.0
  %524 = vmatpush1.msra.mxu0 0.0
  %525 = vmatprep.subr.mxu0 0.0
  %526 = vmatpush1.msra.mxu0 0.0
  %527 = vmatprep.subr.mxu0 0.0
  %528 = vmatpush1.msra.mxu0 0.0
  %529 = vmatprep.subr.mxu0 0.0
  %530 = vmatpush1.msra.mxu0 0.0
  %531 = vmatprep.subr.mxu0 0.0
  %532 = vmatpush1.msra.mxu0 0.0
  %533 = vmatprep.subr.mxu0 0.0
  %534 = vmatpush1.msra.mxu0 0.0
  %535 = vmatprep.subr.mxu0 0.0
  %536 = vmatpush1.msra.mxu0 0.0
  %537 = vmatprep.subr.mxu0 0.0
  %538 = vmatpush1.msra.mxu0 0.0
  %539 = vmatprep.subr.mxu0 0.0
  %540 = vmatpush1.msra.mxu0 0.0
  %541 = vmatprep.subr.mxu0 0.0
  %542 = vmatpush1.msra.mxu0 0.0
  %543 = vmatprep.subr.mxu0 0.0
  %544 = vmatpush1.msra.mxu0 0.0
  %545 = vmatprep.subr.mxu0 0.0
  %546 = vmatpush1.msra.mxu0 0.0
  %547 = vmatprep.subr.mxu0 0.0
  %548 = vmatpush1.msra.mxu0 0.0
  %549 = vmatprep.subr.mxu0 0.0
  %550 = vmatpush1.msra.mxu0 0.0
  %551 = vmatprep.subr.mxu0 0.0
  %552 = vmatpush1.msra.mxu0 0.0
  %553 = vmatprep.subr.mxu0 0.0
  %554 = vmatpush1.msra.mxu0 0.0
  %555 = vmatprep.subr.mxu0 0.0
  %556 = vmatpush1.msra.mxu0 0.0
  %557 = vmatprep.subr.mxu0 0.0
  %558 = vmatpush1.msra.mxu0 0.0
  %559 = vmatprep.subr.mxu0 0.0
  %560 = vmatpush1.msra.mxu0 0.0
  %561 = vmatprep.subr.mxu0 0.0
  %562 = vmatpush1.msra.mxu0 0.0
  %563 = vmatprep.subr.mxu0 0.0
  %564 = vmatpush1.msra.mxu0 0.0
  %565 = vmatprep.subr.mxu0 0.0
  %566 = vmatpush1.msra.mxu0 0.0
  %567 = vmatprep.subr.mxu0 0.0
  %568 = vmatpush1.msra.mxu0 0.0
  %569 = vmatprep.subr.mxu0 0.0
  %570 = vmatpush1.msra.mxu0 0.0
  %571 = vmatprep.subr.mxu0 0.0
  %572 = vmatpush1.msra.mxu0 0.0
  %573 = vmatprep.subr.mxu0 0.0
  %574 = vmatpush1.msra.mxu0 0.0
  %575 = vmatprep.subr.mxu0 0.0
  %576 = vmatpush1.msra.mxu0 0.0
  %577 = vmatprep.subr.mxu0 0.0
  %578 = vmatpush1.msra.mxu0 0.0
  %579 = vmatprep.subr.mxu0 0.0
  %580 = vmatpush1.msra.mxu0 0.0
  %581 = vmatprep.subr.mxu0 0.0
  %582 = vmatpush1.msra.mxu0 0.0
  %583 = vmatprep.mubr.f32.mxu0 0.0
  %584 = vmatmul.mubr.f32.gmra.mrb[0].mxu0 %v513
  %v585 = vpop.f32.mrb[0].mxu0
  %v586 = vadd.f32 %v498, %v585
  %v587 = vpop.f32.mrb[0].mxu0
  %v588 = vadd.f32 %v498, %v587
  %589 = vdwg.mxu0
  %v590 = vmax.f32 %v586, 0.0
  %v591 = vmax.f32 %v588, 0.0
  %v594 = vcombine.low %v590, %v591
  %596 = vst [vmem:[%s6] sm:$0xff] %v594
  %v597 = vrot.slane %v492, 4
  %v598 = vrot.slane %v493, 4
  %v599 = vrot.slane %v494, 4
  %600 = vrot.lane.b32.xlu0 %v597, 17
  %v601 = vpop.permute.xlu0 %600
  %602 = vrot.lane.b32.xlu0 %v598, 17
  %v603 = vpop.permute.xlu0 %602
  %604 = vrot.lane.b32.xlu0 %v599, 17
  %v605 = vpop.permute.xlu0 %604
  %v606 = vsel %vm509, %v601, %v603
  %v607 = vsel %vm509, %v603, %v605
  %v608 = vsel %vm41, %v606, 0
  %v610 = vsel %vm41, %v607, 0
  %612 = vmatprep.subr.mxu0 %v610
  %613 = vmatpush1.msra.mxu0 %v608
  %614 = vmatprep.subr.mxu0 0.0
  %615 = vmatpush1.msra.mxu0 0.0
  %616 = vmatprep.subr.mxu0 0.0
  %617 = vmatpush1.msra.mxu0 0.0
  %618 = vmatprep.subr.mxu0 0.0
  %619 = vmatpush1.msra.mxu0 0.0
  %620 = vmatprep.subr.mxu0 0.0
  %621 = vmatpush1.msra.mxu0 0.0
  %622 = vmatprep.subr.mxu0 0.0
  %623 = vmatpush1.msra.mxu0 0.0
  %624 = vmatprep.subr.mxu0 0.0
  %625 = vmatpush1.msra.mxu0 0.0
  %626 = vmatprep.subr.mxu0 0.0
  %627 = vmatpush1.msra.mxu0 0.0
  %628 = vmatprep.subr.mxu0 0.0
  %629 = vmatpush1.msra.mxu0 0.0
  %630 = vmatprep.subr.mxu0 0.0
  %631 = vmatpush1.msra.mxu0 0.0
  %632 = vmatprep.subr.mxu0 0.0
  %633 = vmatpush1.msra.mxu0 0.0
  %634 = vmatprep.subr.mxu0 0.0
  %635 = vmatpush1.msra.mxu0 0.0
  %636 = vmatprep.subr.mxu0 0.0
  %637 = vmatpush1.msra.mxu0 0.0
  %638 = vmatprep.subr.mxu0 0.0
  %639 = vmatpush1.msra.mxu0 0.0
  %640 = vmatprep.subr.mxu0 0.0
  %641 = vmatpush1.msra.mxu0 0.0
  %642 = vmatprep.subr.mxu0 0.0
  %643 = vmatpush1.msra.mxu0 0.0
  %644 = vmatprep.subr.mxu0 0.0
  %645 = vmatpush1.msra.mxu0 0.0
  %646 = vmatprep.subr.mxu0 0.0
  %647 = vmatpush1.msra.mxu0 0.0
  %648 = vmatprep.subr.mxu0 0.0
  %649 = vmatpush1.msra.mxu0 0.0
  %650 = vmatprep.subr.mxu0 0.0
  %651 = vmatpush1.msra.mxu0 0.0
  %652 = vmatprep.subr.mxu0 0.0
  %653 = vmatpush1.msra.mxu0 0.0
  %654 = vmatprep.subr.mxu0 0.0
  %655 = vmatpush1.msra.mxu0 0.0
  %656 = vmatprep.subr.mxu0 0.0
  %657 = vmatpush1.msra.mxu0 0.0
  %658 = vmatprep.subr.mxu0 0.0
  %659 = vmatpush1.msra.mxu0 0.0
  %660 = vmatprep.subr.mxu0 0.0
  %661 = vmatpush1.msra.mxu0 0.0
  %662 = vmatprep.subr.mxu0 0.0
  %663 = vmatpush1.msra.mxu0 0.0
  %664 = vmatprep.subr.mxu0 0.0
  %665 = vmatpush1.msra.mxu0 0.0
  %666 = vmatprep.subr.mxu0 0.0
  %667 = vmatpush1.msra.mxu0 0.0
  %668 = vmatprep.subr.mxu0 0.0
  %669 = vmatpush1.msra.mxu0 0.0
  %670 = vmatprep.subr.mxu0 0.0
  %671 = vmatpush1.msra.mxu0 0.0
  %672 = vmatprep.subr.mxu0 0.0
  %673 = vmatpush1.msra.mxu0 0.0
  %674 = vmatprep.subr.mxu0 0.0
  %675 = vmatpush1.msra.mxu0 0.0
  %676 = vmatprep.mubr.f32.mxu0 0.0
  %677 = vmatmul.mubr.f32.gmra.mrb[0].mxu0 %v513
  %v678 = vpop.f32.mrb[0].mxu0
  %v679 = vadd.f32 %v498, %v678
  %v680 = vpop.f32.mrb[0].mxu0
  %v681 = vadd.f32 %v498, %v680
  %682 = vdwg.mxu0
  %v683 = vmax.f32 %v679, 0.0
  %v684 = vmax.f32 %v681, 0.0
  %v687 = vcombine.low %v683, %v684
  %s689 = scalar_lea.vmem %s6, 8
  %690 = vst [vmem:[%s689] sm:$0xff] %v687
  // Predicated region
  $region26: #{invert_residual.1} parent=0 // pred_check
    _
  $region27: #{invert_residual.1} parent=0 // pred_check_branch
    %692 = sbr.rel (0) target = $region29
  $region28: #{invert_residual.1} parent=0 // pred_region
    _
  $region29: #{invert_residual.1} parent=0 // pred_fallthru
    _
  // Predicated region
  $region30: #{invert_residual.1} parent=0 // pred_check
    _
  $region31: #{invert_residual.1} parent=0 // pred_check_branch
    %694 = sbr.rel (0) target = $region33
  $region32: #{invert_residual.1} parent=0 // pred_region
    _
  $region33: #{invert_residual.1} parent=0 // pred_fallthru
    _

</llo_original>
